<compile_context>
chip_gen: v6e
topology: v6e:2x2x1
jax: 0.10.0
libtpu: 0.0.40
codegen_flags: <defaults>
</compile_context>

<pallas_src>
import functools

import jax
import jax.numpy as jnp
from jax.experimental import pallas as pl
from jax.experimental.pallas import tpu as pltpu


def _rmsnorm_kernel(x_ref, g_ref, o_ref, *, eps_sq):
    # x_ref: (tile_rows, D), g_ref: (1, D) f32 = (gamma + 1) * sqrt(D), o_ref: (tile_rows, D)
    x = x_ref[...].astype(jnp.float32)
    ss = jnp.sum(x * x, axis=-1, keepdims=True)              # (tile_rows, 1)
    inv = jax.lax.rsqrt(jnp.maximum(ss, eps_sq))             # == 1 / max(||x||_2, eps)
    o_ref[...] = (x * inv * g_ref[...]).astype(o_ref.dtype)


def _sublane_multiple(dtype):
    # f32 -> 8, bf16 -> 16, int8/fp8 -> 32 (packed sublanes).
    itemsize = jnp.dtype(dtype).itemsize
    return max(8, 32 // itemsize)


def _pick_tile_rows(R, D, dtype, vmem_budget_bytes):
    """Largest row tile whose double-buffered in/out tiles + f32 temps fit the budget."""
    itemsize = jnp.dtype(dtype).itemsize
    # 2 buffers x (input tile + output tile) + ~3 f32 temporaries per row in-kernel.
    per_row = 2 * 2 * D * itemsize + 3 * D * 4
    t = int(vmem_budget_bytes // max(per_row, 1))
    t = max(1, min(t, 1024))
    if t >= R:
        return R                      # one block covering all rows (equals full dim -> legal)
    mult = _sublane_multiple(dtype)
    t = max(mult, (t // mult) * mult)  # keep (8,128)-tiling-friendly row counts
    return t


def rmsnorm(x, gamma, *, eps=1e-12, tile_rows=None, vmem_budget_bytes=24 << 20):
    """x: (..., D), gamma: (D,). Returns same shape/dtype as x."""
    orig_shape = x.shape
    D = orig_shape[-1]
    assert gamma.shape == (D,)

    x2d = x.reshape(-1, D)
    R = x2d.shape[0]

    # Hoist the affine transform: one tiny f32 vector, loaded once, VMEM-resident.
    g_eff = ((gamma.astype(jnp.float32) + 1.0) * (float(D) ** 0.5)).reshape(1, D)

    if tile_rows is None:
        tile_rows = _pick_tile_rows(R, D, x.dtype, vmem_budget_bytes)

    grid = (pl.cdiv(R, tile_rows),)
    kernel = functools.partial(_rmsnorm_kernel, eps_sq=float(eps) ** 2)

    out = pl.pallas_call(
        kernel,
        out_shape=jax.ShapeDtypeStruct((R, D), x.dtype),
        grid_spec=pltpu.PrefetchScalarGridSpec(
            num_scalar_prefetch=0,
            grid=grid,
            in_specs=[
                pl.BlockSpec((tile_rows, D), lambda i: (i, 0)),
                pl.BlockSpec((1, D), lambda i: (0, 0)),   # constant block: stays resident
            ],
            out_specs=pl.BlockSpec((tile_rows, D), lambda i: (i, 0)),
        ),
        compiler_params=pltpu.CompilerParams(
            dimension_semantics=("parallel",),            # lets v7x shard rows across 2 TCs
            vmem_limit_bytes=48 << 20,                    # above scoped defaults, < v7x 64 MiB
        ),
    )(x2d, g_eff)

    return out.reshape(orig_shape)


def rmsnorm_ref(x, gamma):
    xf = x.astype(jnp.float32)
    D = x.shape[-1]
    l2 = jnp.sqrt(jnp.sum(xf * xf, axis=-1, keepdims=True))
    normed = xf / jnp.maximum(l2, 1e-12)
    return (normed * (float(D) ** 0.5) * (gamma.astype(jnp.float32) + 1.0)).astype(x.dtype)


if __name__ == "__main__":
    key = jax.random.PRNGKey(0)
    k0, k1, k2, kg = jax.random.split(key, 4)

    # Case 1: shapes implied by the module (batch=2, seq=8, hidden=32), f32,
    # gamma init matching nn.Parameter(torch.zeros(dim)).
    B, S, D = 2, 8, 32
    x = jax.random.normal(k0, (B, S, D), dtype=jnp.float32)
    gamma = jnp.zeros((D,), dtype=jnp.float32)
    out = jax.block_until_ready(rmsnorm(x, gamma))
    assert out.shape == x.shape and out.dtype == x.dtype
    assert jnp.allclose(out, rmsnorm_ref(x, gamma), atol=1e-5, rtol=1e-5)

    # Case 2: ragged row count (21 rows, tile_rows=8) + non-zero gamma,
    # exercising the masked tail block (no jnp.pad path anymore).
    x2 = jax.random.normal(k1, (3, 7, 128), dtype=jnp.float32)
    g2 = 0.1 * jax.random.normal(kg, (128,), dtype=jnp.float32)
    out2 = jax.block_until_ready(rmsnorm(x2, g2, tile_rows=8))
    assert jnp.allclose(out2, rmsnorm_ref(x2, g2), atol=1e-5, rtol=1e-5)

    # Case 3: bf16 input (packed-sublane tile multiple handled automatically).
    x3 = jax.random.normal(k2, (2, 16, 256), dtype=jnp.bfloat16)
    g3 = jnp.zeros((256,), dtype=jnp.float32)
    out3 = jax.block_until_ready(rmsnorm(x3, g3))
    ref3 = rmsnorm_ref(x3.astype(jnp.float32), g3)
    assert jnp.allclose(out3.astype(jnp.float32), ref3, atol=2e-2, rtol=2e-2)

    print("KERNEL_OK")
</pallas_src>

<mosaic_0001>
module attributes {stable_mosaic.version = 11 : i64} {
  func.func @_rmsnorm_kernel(%arg0: i32, %arg1: memref<16x32xf32, #tpu.memory_space<vmem>>, %arg2: memref<1x32xf32, #tpu.memory_space<vmem>>, %arg3: memref<16x32xf32, #tpu.memory_space<vmem>>) attributes {dimension_semantics = [#tpu.dimension_semantics<parallel>], iteration_bounds = array<i64: 1>, scalar_prefetch = 0 : i64, scratch_operands = 0 : i64, tpu.core_type = #tpu.core_type<tc>, window_params = [{transform_indices = @transform_0, window_bounds = array<i64: 16, 32>}, {pipeline_mode = #tpu.pipeline_mode<synchronous>, transform_indices = @transform_1, window_bounds = array<i64: 1, 32>}, {transform_indices = @transform_2, window_bounds = array<i64: 16, 32>}]} {
    %c0 = arith.constant 0 : index
    %c0_0 = arith.constant 0 : index
    %0 = vector.load %arg1[%c0, %c0_0] : memref<16x32xf32, #tpu.memory_space<vmem>>, vector<16x32xf32>
    %1 = arith.mulf %0, %0 : vector<16x32xf32>
    %cst = arith.constant dense<0.000000e+00> : vector<16xf32>
    %2 = vector.multi_reduction <add>, %1, %cst [1] : vector<16x32xf32> to vector<16xf32>
    %3 = vector.shape_cast %2 : vector<16xf32> to vector<16x1xf32>
    %cst_1 = arith.constant 1.000000e-24 : f32
    %4 = vector.broadcast %cst_1 : f32 to vector<16x1xf32>
    %5 = arith.maximumf %3, %4 : vector<16x1xf32>
    %6 = math.rsqrt %5 : vector<16x1xf32>
    %7 = vector.broadcast %6 : vector<16x1xf32> to vector<16x32xf32>
    %8 = arith.mulf %0, %7 : vector<16x32xf32>
    %c0_2 = arith.constant 0 : index
    %c0_3 = arith.constant 0 : index
    %9 = vector.load %arg2[%c0_2, %c0_3] : memref<1x32xf32, #tpu.memory_space<vmem>>, vector<1x32xf32>
    %10 = vector.broadcast %9 : vector<1x32xf32> to vector<16x32xf32>
    %11 = arith.mulf %8, %10 : vector<16x32xf32>
    %c0_4 = arith.constant 0 : index
    %c0_5 = arith.constant 0 : index
    %12 = vector.load %arg3[%c0_4, %c0_5] : memref<16x32xf32, #tpu.memory_space<vmem>>, vector<16x32xf32>
    tpu.vector_store %arg3[%c0_4, %c0_5], %11 {strides = array<i32>} : memref<16x32xf32, #tpu.memory_space<vmem>>, vector<16x32xf32>,
    return
  }
  func.func @transform_0(%arg0: i32) -> (i32, i32) {
    %c0_i32 = arith.constant 0 : i32
    %c0_i32_0 = arith.constant 0 : i32
    return %arg0, %c0_i32 : i32, i32
  }
  func.func @transform_1(%arg0: i32) -> (i32, i32) {
    %c0_i32 = arith.constant 0 : i32
    %c0_i32_0 = arith.constant 0 : i32
    %c0_i32_1 = arith.constant 0 : i32
    return %c0_i32, %c0_i32_0 : i32, i32
  }
  func.func @transform_2(%arg0: i32) -> (i32, i32) {
    %c0_i32 = arith.constant 0 : i32
    %c0_i32_0 = arith.constant 0 : i32
    return %arg0, %c0_i32 : i32, i32
  }
}

</mosaic_0001>

<llo_original>
// kernel: tpu_custom_call.1
$region0: #{tpu_custom_call.1}
  #allocation0 [shape = 'u32[]', space=smem, size = 0x4, offset = 0x4, fixed_abs, tag = 'smem constant byte address 0x4 - core index']
  #allocation1 [shape = 'u32[144,128]{1,0:T(1,128)}', space=vmem, size = 0x12000, scoped, tag = 'internal scratch']
  %s0 = inlined_call_operand.hbm [shape: f32[16,32], index: 0, kind: input, shape index: {}]
  %s1 = inlined_call_operand.vmem [shape: f32[1,32], index: 1, kind: input, shape index: {}]
  %s2 = inlined_call_operand.hbm [shape: f32[16,32], index: 2, kind: output, shape index: {}]
  %s3 = sld [smem:[#allocation0]]
  $region22: #{tpu_custom_call.1} parent=0
    _
  %s5 = ssub.s32 1, %s3
  %s6 = scalar_select 0, %s5, %s3
  $region1: #{tpu_custom_call.1} parent=0
    #allocation2 [shape = 'u8[8192]{0}', space=vmem, size = 0x2000, scoped, tag = 'input window, operand 0, single buffered']
    #allocation3 [shape = 's32[1]{0}', space=sflag, size = 0x4, scoped, tag = 'scoped memory for tpu_custom_call.1']
    #allocation4 [shape = 's32[1]{0}', space=sflag, size = 0x4, scoped, tag = 'scoped memory for tpu_custom_call.1']
    #allocation5 [shape = 'u8[8192]{0}', space=vmem, size = 0x2000, scoped, tag = 'output window, operand 0, single buffered']
    %7 = vsyncpa [#allocation3], 0
    %8 = vsyncpa [#allocation4], 0
    // Predicated region
    $region2: #{tpu_custom_call.1} parent=1 // pred_check
      _
    $region3: #{tpu_custom_call.1} parent=1 // pred_check_branch
      %10 = sbr.rel (0) target = $region5
    $region4: #{tpu_custom_call.1} parent=1 // pred_region
      %s12 = ssub.s32 256, 256
      %13 = vsyncadd [#allocation3], %s12
      %s14 = sshll.u32 [#allocation2], 4
      %s15 = int_to_ptr.vmem [resolvable:$true] %s14
      %20 = dma.hbm_to_vmem [thread:$0]  %s0, 256, %s15, [#allocation3], 128, 128, 8
    $region5: #{tpu_custom_call.1} parent=1 // pred_fallthru
      _
    // Predicated region
    $region6: #{tpu_custom_call.1} parent=1 // pred_check
      _
    $region7: #{tpu_custom_call.1} parent=1 // pred_check_branch
      %22 = sbr.rel (0) target = $region9
    $region8: #{tpu_custom_call.1} parent=1 // pred_region
      _
    $region9: #{tpu_custom_call.1} parent=1 // pred_fallthru
      _
    // Predicated region
    $region10: #{tpu_custom_call.1} parent=1 // pred_check
      _
    $region11: #{tpu_custom_call.1} parent=1 // pred_check_branch
      %24 = sbr.rel (0) target = $region13
    $region12: #{tpu_custom_call.1} parent=1 // pred_region
      %25 = dma.done [#allocation3], 256
    $region13: #{tpu_custom_call.1} parent=1 // pred_fallthru
      _
    %v26 = vld [vmem:[#allocation2] sm:$0xff]
    %v27 = vld [vmem:[#allocation2 + $0x8] sm:$0xff]
    %v28 = vmul.f32 %v26, %v26
    %v29 = vmul.f32 %v27, %v27
    %vm30 = vcmask 261120
    %v31 = vsel %vm30, %v28, 0.0
    %32 = vadd.xlane.f32.xlu0 %v31
    %v33 = vpop.xlane.xlu0 %32
    %v34 = vsel %vm30, %v29, 0.0
    %35 = vadd.xlane.f32.xlu0 %v34
    %v36 = vpop.xlane.xlu0 %35
    %v37 = vmax.f32 %v33, 1e-24
    %v38 = vmax.f32 %v36, 1e-24
    %v39 = vrsqrt.pop %v37
    %v40 = vrsqrt.pop %v38
    %v41 = vmul.f32 %v26, %v39
    %v42 = vmul.f32 %v27, %v40
    %v43 = vld [vmem:[%s1] sm:$0x1]
    %v45 = vlaneseq
    %v46 = vshrl.u32 %v45, 7
    %v47 = vsub.s32 0, %v46
    %v48 = vrot.slane %v43, %v47
    %v50 = vmul.f32 %v41, %v48
    %v51 = vmul.f32 %v42, %v48
    %52 = vst.msk [vmem:[#allocation5] sm:$0xff] %vm30, %v50
    %53 = vst.msk [vmem:[#allocation5 + $0x8] sm:$0xff] %vm30, %v51
    // Predicated region
    $region14: #{tpu_custom_call.1} parent=1 // pred_check
      _
    $region15: #{tpu_custom_call.1} parent=1 // pred_check_branch
      %55 = sbr.rel (0) target = $region17
    $region16: #{tpu_custom_call.1} parent=1 // pred_region
      %s57 = ssub.s32 256, 256
      %58 = vsyncadd [#allocation4], %s57
      %s59 = sshll.u32 [#allocation5], 4
      %s60 = int_to_ptr.vmem [resolvable:$true] %s59
      %65 = dma.vmem_to_hbm [thread:$0]  %s60, 256, %s2, [#allocation4], 128, 128, 8
    $region17: #{tpu_custom_call.1} parent=1 // pred_fallthru
      _
    // Predicated region
    $region18: #{tpu_custom_call.1} parent=1 // pred_check
      _
    $region19: #{tpu_custom_call.1} parent=1 // pred_check_branch
      %67 = sbr.rel (0) target = $region21
    $region20: #{tpu_custom_call.1} parent=1 // pred_region
      %68 = dma.done [#allocation4], 256
    $region21: #{tpu_custom_call.1} parent=1 // pred_fallthru
      _
    %69 = vsyncpa [#allocation3], 1
    %70 = vsyncpa [#allocation4], 1

</llo_original>
